<compile_context>
chip_gen: v6e
topology: v6e:2x2x1
jax: 0.10.0
libtpu: 0.0.40
codegen_flags: <defaults>
</compile_context>

<pallas_src>
import jax
import jax.numpy as jnp
from jax.experimental import pallas as pl
from jax.experimental.pallas import tpu as pltpu

# ---------------- model hyper-parameters (small, lane-aligned) ----------------
BATCH = 16          # total rows
INPUT_SIZE = 256    # AlignProjector input_size  (multiple of 128 lanes)
OUTPUT_SIZE = 128   # AlignProjector output_size (multiple of 128 lanes)


# ---------------- fused Pallas kernel ----------------
def _align_projector_kernel(x_ref, w_ref, o_ref):
    # x_ref: (block_b, D_in) f32, w_ref: (D_in, D_out) bf16, o_ref: (block_b, D_out) f32
    x = x_ref[...]
    # embedding / embedding.norm(dim=1, keepdim=True)  (rsqrt -> EUP, row-reduce -> XLU)
    inv_in = jax.lax.rsqrt(jnp.sum(x * x, axis=-1, keepdims=True))
    xn = (x * inv_in).astype(jnp.bfloat16)            # bf16 MXU inputs
    # Linear(input_size, output_size, bias=False): xn @ W  (W presented as (in, out))
    y = jnp.dot(xn, w_ref[...], preferred_element_type=jnp.float32)
    # second L2 normalization, in f32
    inv_out = jax.lax.rsqrt(jnp.sum(y * y, axis=-1, keepdims=True))
    o_ref[...] = (y * inv_out).astype(o_ref.dtype)


def align_projector_forward(embedding, weight, *, tile_b=512):
    """AlignProjector forward.

    embedding: (B, input_size) float32
    weight:    (output_size, input_size) float32  -- PyTorch nn.Linear layout
    """
    B, d_in = embedding.shape
    d_out, d_in_w = weight.shape
    assert d_in == d_in_w, "weight must be (output_size, input_size) like nn.Linear"

    # PyTorch Linear computes x @ W.T; present a lane-dense (in, out) bf16 weight
    # to the MXU. (In a real model the weight would be stored pre-transposed in
    # bf16 once, not converted per call.)
    w = weight.T.astype(jnp.bfloat16)

    cost = pl.CostEstimate(
        flops=2 * B * d_in * d_out + 3 * B * (d_in + d_out),
        transcendentals=2 * B,                                   # two rsqrt per row
        bytes_accessed=4 * B * d_in + 2 * d_in * d_out + 4 * B * d_out)

    if B <= tile_b:
        # Small batch: one grid-less invocation, everything resident in VMEM.
        return pl.pallas_call(
            _align_projector_kernel,
            out_shape=jax.ShapeDtypeStruct((B, d_out), jnp.float32),
            in_specs=[pl.BlockSpec(memory_space=pltpu.MemorySpace.VMEM),
                      pl.BlockSpec(memory_space=pltpu.MemorySpace.VMEM)],
            out_specs=pl.BlockSpec(memory_space=pltpu.MemorySpace.VMEM),
            cost_estimate=cost,
        )(embedding, w)

    # Large batch: tile rows; weight index_map is constant so it is fetched once.
    assert B % tile_b == 0, "tiled path requires B % tile_b == 0"
    semantics = ("parallel",) if tile_b >= 256 else ("arbitrary",)
    return pl.pallas_call(
        _align_projector_kernel,
        out_shape=jax.ShapeDtypeStruct((B, d_out), jnp.float32),
        grid=(B // tile_b,),
        in_specs=[pl.BlockSpec((tile_b, d_in), lambda i: (i, 0)),
                  pl.BlockSpec((d_in, d_out), lambda i: (0, 0))],
        out_specs=pl.BlockSpec((tile_b, d_out), lambda i: (i, 0)),
        compiler_params=pltpu.CompilerParams(dimension_semantics=semantics),
        cost_estimate=cost,
    )(embedding, w)


# ---------------- pure-JAX references (for in-script validation) ----------------
def align_projector_reference(embedding, weight, *, matmul_dtype=jnp.float32):
    """weight in PyTorch (out, in) layout."""
    xn = embedding / jnp.linalg.norm(embedding, axis=1, keepdims=True)
    if matmul_dtype == jnp.float32:
        y = jnp.dot(xn, weight.T, precision=jax.lax.Precision.HIGHEST)
    else:
        y = jnp.dot(xn.astype(matmul_dtype), weight.T.astype(matmul_dtype),
                    preferred_element_type=jnp.float32)
    return y / jnp.linalg.norm(y, axis=1, keepdims=True)


if __name__ == "__main__":
    root = jax.random.PRNGKey(0)
    k_emb, k_w = jax.random.split(root, 2)

    embedding = jax.random.normal(k_emb, (BATCH, INPUT_SIZE), dtype=jnp.float32)
    # Xavier-style init for the bias-free projection weight, PyTorch (out, in) layout.
    std = (2.0 / (INPUT_SIZE + OUTPUT_SIZE)) ** 0.5
    weight = std * jax.random.normal(k_w, (OUTPUT_SIZE, INPUT_SIZE), dtype=jnp.float32)

    fwd = jax.jit(align_projector_forward)
    out = jax.block_until_ready(fwd(embedding, weight))

    assert out.shape == (BATCH, OUTPUT_SIZE)
    assert bool(jnp.all(jnp.isfinite(out)))
    # output rows are unit-norm
    row_norms = jnp.linalg.norm(out, axis=1)
    assert bool(jnp.allclose(row_norms, 1.0, atol=1e-4))

    # Tight check against a reference doing the same bf16-input / f32-accumulate math.
    ref_bf16 = align_projector_reference(embedding, weight, matmul_dtype=jnp.bfloat16)
    assert bool(jnp.allclose(out, ref_bf16, atol=1e-4, rtol=1e-4))

    # Module-semantics check (full f32, HIGHEST precision matmul): bf16 MXU inputs
    # stay within a few 1e-3 after renormalization.
    ref_f32 = align_projector_reference(embedding, weight, matmul_dtype=jnp.float32)
    assert bool(jnp.allclose(out, ref_f32, atol=3e-3, rtol=3e-3))

    # The tiled (large-batch) path produces identical results to the fused path.
    tiled = jax.jit(lambda e, w: align_projector_forward(e, w, tile_b=8))
    out_tiled = jax.block_until_ready(tiled(embedding, weight))
    assert bool(jnp.allclose(out, out_tiled, atol=1e-6, rtol=1e-6))

    print("KERNEL_OK")
</pallas_src>

<mosaic_0001>
module attributes {stable_mosaic.version = 11 : i64} {
  func.func @_align_projector_kernel(%arg0: memref<16x256xf32, #tpu.memory_space<vmem>>, %arg1: memref<256x128xbf16, #tpu.memory_space<vmem>>, %arg2: memref<16x128xf32, #tpu.memory_space<vmem>>) attributes {dimension_semantics = [], scalar_prefetch = 0 : i64, scratch_operands = 0 : i64, tpu.core_type = #tpu.core_type<tc>} {
    %c0 = arith.constant 0 : index
    %c0_0 = arith.constant 0 : index
    %0 = vector.load %arg0[%c0, %c0_0] : memref<16x256xf32, #tpu.memory_space<vmem>>, vector<16x256xf32>
    %1 = arith.mulf %0, %0 : vector<16x256xf32>
    %cst = arith.constant dense<0.000000e+00> : vector<16xf32>
    %2 = vector.multi_reduction <add>, %1, %cst [1] : vector<16x256xf32> to vector<16xf32>
    %3 = vector.shape_cast %2 : vector<16xf32> to vector<16x1xf32>
    %4 = math.rsqrt %3 : vector<16x1xf32>
    %5 = vector.broadcast %4 : vector<16x1xf32> to vector<16x256xf32>
    %6 = arith.mulf %0, %5 : vector<16x256xf32>
    %7 = arith.truncf %6 : vector<16x256xf32> to vector<16x256xbf16>
    %c0_1 = arith.constant 0 : index
    %c0_2 = arith.constant 0 : index
    %8 = vector.load %arg1[%c0_1, %c0_2] : memref<256x128xbf16, #tpu.memory_space<vmem>>, vector<256x128xbf16>
    %cst_3 = arith.constant dense<0.000000e+00> : vector<16x128xf32>
    %9 = tpu.matmul %7, %8, %cst_3 {dimension_numbers = #tpu.dot_dimension_numbers<[1], [0], [0], [1], [0, 0, 1, 1], [], []>} : vector<16x256xbf16>, vector<256x128xbf16>, vector<16x128xf32> -> vector<16x128xf32>
    %10 = arith.mulf %9, %9 : vector<16x128xf32>
    %cst_4 = arith.constant dense<0.000000e+00> : vector<16xf32>
    %11 = vector.multi_reduction <add>, %10, %cst_4 [1] : vector<16x128xf32> to vector<16xf32>
    %12 = vector.shape_cast %11 : vector<16xf32> to vector<16x1xf32>
    %13 = math.rsqrt %12 : vector<16x1xf32>
    %14 = vector.broadcast %13 : vector<16x1xf32> to vector<16x128xf32>
    %15 = arith.mulf %9, %14 : vector<16x128xf32>
    %c0_5 = arith.constant 0 : index
    %c0_6 = arith.constant 0 : index
    %16 = vector.load %arg2[%c0_5, %c0_6] : memref<16x128xf32, #tpu.memory_space<vmem>>, vector<16x128xf32>
    tpu.vector_store %arg2[%c0_5, %c0_6], %15 {strides = array<i32>} : memref<16x128xf32, #tpu.memory_space<vmem>>, vector<16x128xf32>,
    return
  }
}

</mosaic_0001>

<llo_original>
// kernel: align_projector_forward.1
$region0: #{align_projector_forward.1}
  #allocation0 [shape = 'u32[]', space=smem, size = 0x4, offset = 0x4, fixed_abs, tag = 'smem constant byte address 0x4 - core index']
  #allocation1 [shape = 'u32[144,128]{1,0:T(1,128)}', space=vmem, size = 0x12000, scoped, tag = 'internal scratch']
  %s0 = inlined_call_operand.vmem [shape: f32[16,256], index: 0, kind: input, shape index: {}]
  %s1 = inlined_call_operand.vmem [shape: bf16[256,128], index: 1, kind: input, shape index: {}]
  %s2 = inlined_call_operand.hbm [shape: f32[16,128], index: 2, kind: output, shape index: {}]
  %s3 = sld [smem:[#allocation0]]
  $region18: #{align_projector_forward.1} parent=0
    _
  %s5 = ssub.s32 1, %s3
  %s6 = scalar_select 0, %s5, %s3
  $region1: #{align_projector_forward.1} parent=0
    #allocation2 [shape = 'u8[8192]{0}', space=vmem, size = 0x2000, scoped, tag = 'output window, operand 0, single buffered']
    #allocation3 [shape = 's32[1]{0}', space=sflag, size = 0x4, scoped, tag = 'scoped memory for align_projector_forward.1']
    %7 = vsyncpa [#allocation3], 0
    // Predicated region
    $region2: #{align_projector_forward.1} parent=1 // pred_check
      _
    $region3: #{align_projector_forward.1} parent=1 // pred_check_branch
      %9 = sbr.rel (0) target = $region5
    $region4: #{align_projector_forward.1} parent=1 // pred_region
      _
    $region5: #{align_projector_forward.1} parent=1 // pred_fallthru
      _
    // Predicated region
    $region6: #{align_projector_forward.1} parent=1 // pred_check
      _
    $region7: #{align_projector_forward.1} parent=1 // pred_check_branch
      %11 = sbr.rel (0) target = $region9
    $region8: #{align_projector_forward.1} parent=1 // pred_region
      _
    $region9: #{align_projector_forward.1} parent=1 // pred_fallthru
      _
    %v13 = vld [vmem:[%s0] sm:$0xff]
    %v14 = vld [vmem:[%s0 + $0x8] sm:$0xff]
    %v15 = vld [vmem:[%s0 + $0x10] sm:$0xff]
    %v16 = vld [vmem:[%s0 + $0x18] sm:$0xff]
    %v17 = vmul.f32 %v13, %v13
    %v18 = vmul.f32 %v14, %v14
    %v19 = vmul.f32 %v15, %v15
    %v20 = vmul.f32 %v16, %v16
    %v21 = vadd.f32 %v17, %v18
    %22 = vadd.xlane.f32.xlu0 %v21
    %v23 = vpop.xlane.xlu0 %22
    %v24 = vadd.f32 %v19, %v20
    %25 = vadd.xlane.f32.xlu0 %v24
    %v26 = vpop.xlane.xlu0 %25
    %v27 = vrsqrt.pop %v23
    %v28 = vrsqrt.pop %v26
    %v29 = vmul.f32 %v13, %v27
    %v30 = vmul.f32 %v14, %v27
    %v31 = vmul.f32 %v15, %v28
    %v32 = vmul.f32 %v16, %v28
    %v33 = vpack.c.bf16 %v31, %v29
    %v34 = vpack.c.bf16 %v32, %v30
    %v35 = vld [vmem:[%s1] sm:$0xf]
    %v36 = vld [vmem:[%s1 + $0x4] sm:$0xf]
    %v37 = vld [vmem:[%s1 + $0x8] sm:$0xf]
    %v38 = vld [vmem:[%s1 + $0xc] sm:$0xf]
    %v39 = vld [vmem:[%s1 + $0x10] sm:$0xf]
    %v40 = vld [vmem:[%s1 + $0x14] sm:$0xf]
    %v41 = vld [vmem:[%s1 + $0x18] sm:$0xf]
    %v42 = vld [vmem:[%s1 + $0x1c] sm:$0xf]
    %v43 = vld [vmem:[%s1 + $0x20] sm:$0xf]
    %v44 = vld [vmem:[%s1 + $0x24] sm:$0xf]
    %v45 = vld [vmem:[%s1 + $0x28] sm:$0xf]
    %v46 = vld [vmem:[%s1 + $0x2c] sm:$0xf]
    %v47 = vld [vmem:[%s1 + $0x30] sm:$0xf]
    %v48 = vld [vmem:[%s1 + $0x34] sm:$0xf]
    %v49 = vld [vmem:[%s1 + $0x38] sm:$0xf]
    %v50 = vld [vmem:[%s1 + $0x3c] sm:$0xf]
    %v51 = vld [vmem:[%s1 + $0x40] sm:$0xf]
    %v52 = vld [vmem:[%s1 + $0x44] sm:$0xf]
    %v53 = vld [vmem:[%s1 + $0x48] sm:$0xf]
    %v54 = vld [vmem:[%s1 + $0x4c] sm:$0xf]
    %v55 = vld [vmem:[%s1 + $0x50] sm:$0xf]
    %v56 = vld [vmem:[%s1 + $0x54] sm:$0xf]
    %v57 = vld [vmem:[%s1 + $0x58] sm:$0xf]
    %v58 = vld [vmem:[%s1 + $0x5c] sm:$0xf]
    %v59 = vld [vmem:[%s1 + $0x60] sm:$0xf]
    %v60 = vld [vmem:[%s1 + $0x64] sm:$0xf]
    %v61 = vld [vmem:[%s1 + $0x68] sm:$0xf]
    %v62 = vld [vmem:[%s1 + $0x6c] sm:$0xf]
    %v63 = vld [vmem:[%s1 + $0x70] sm:$0xf]
    %v64 = vld [vmem:[%s1 + $0x74] sm:$0xf]
    %v65 = vld [vmem:[%s1 + $0x78] sm:$0xf]
    %v66 = vld [vmem:[%s1 + $0x7c] sm:$0xf]
    %v99 = vunpack.c.l.b16 %v35
    %v100 = vunpack.c.l.b16 %v36
    %v101 = vunpack.c.l.b16 %v37
    %v102 = vunpack.c.l.b16 %v38
    %v103 = vunpack.c.l.b16 %v39
    %v104 = vunpack.c.l.b16 %v40
    %v105 = vunpack.c.l.b16 %v41
    %v106 = vunpack.c.l.b16 %v42
    %v107 = vunpack.c.l.b16 %v43
    %v108 = vunpack.c.l.b16 %v44
    %v109 = vunpack.c.l.b16 %v45
    %v110 = vunpack.c.l.b16 %v46
    %v111 = vunpack.c.l.b16 %v47
    %v112 = vunpack.c.l.b16 %v48
    %v113 = vunpack.c.l.b16 %v49
    %v114 = vunpack.c.l.b16 %v50
    %v115 = vunpack.c.l.b16 %v51
    %v116 = vunpack.c.l.b16 %v52
    %v117 = vunpack.c.l.b16 %v53
    %v118 = vunpack.c.l.b16 %v54
    %v119 = vunpack.c.l.b16 %v55
    %v120 = vunpack.c.l.b16 %v56
    %v121 = vunpack.c.l.b16 %v57
    %v122 = vunpack.c.l.b16 %v58
    %v123 = vunpack.c.l.b16 %v59
    %v124 = vunpack.c.l.b16 %v60
    %v125 = vunpack.c.l.b16 %v61
    %v126 = vunpack.c.l.b16 %v62
    %v127 = vunpack.c.l.b16 %v63
    %v128 = vunpack.c.l.b16 %v64
    %v129 = vunpack.c.l.b16 %v65
    %v130 = vunpack.c.l.b16 %v66
    %v131 = vpack.c.b16 %v100, %v99
    %v132 = vpack.c.b16 %v102, %v101
    %v133 = vpack.c.b16 %v104, %v103
    %v134 = vpack.c.b16 %v106, %v105
    %v135 = vpack.c.b16 %v108, %v107
    %v136 = vpack.c.b16 %v110, %v109
    %v137 = vpack.c.b16 %v112, %v111
    %v138 = vpack.c.b16 %v114, %v113
    %v139 = vpack.c.b16 %v116, %v115
    %v140 = vpack.c.b16 %v118, %v117
    %v141 = vpack.c.b16 %v120, %v119
    %v142 = vpack.c.b16 %v122, %v121
    %v143 = vpack.c.b16 %v124, %v123
    %v144 = vpack.c.b16 %v126, %v125
    %v145 = vpack.c.b16 %v128, %v127
    %v146 = vpack.c.b16 %v130, %v129
    %163 = vmatprep.subr.bf16.mxu0 0
    %164 = vmatpush1.bf16.msra.mxu0 %v138
    %165 = vmatprep.subr.bf16.mxu0 0
    %166 = vmatpush1.bf16.msra.mxu0 %v137
    %167 = vmatprep.subr.bf16.mxu0 0
    %168 = vmatpush1.bf16.msra.mxu0 %v136
    %169 = vmatprep.subr.bf16.mxu0 0
    %170 = vmatpush1.bf16.msra.mxu0 %v135
    %171 = vmatprep.subr.bf16.mxu0 0
    %172 = vmatpush1.bf16.msra.mxu0 %v134
    %173 = vmatprep.subr.bf16.mxu0 0
    %174 = vmatpush1.bf16.msra.mxu0 %v133
    %175 = vmatprep.subr.bf16.mxu0 0
    %176 = vmatpush1.bf16.msra.mxu0 %v132
    %177 = vmatprep.subr.bf16.mxu0 0
    %178 = vmatpush1.bf16.msra.mxu0 %v131
    %179 = vmatprep.subr.bf16.mxu0 0
    %180 = vmatpush2.bf16.msra.mxu0 %v146
    %181 = vmatprep.subr.bf16.mxu0 0
    %182 = vmatpush2.bf16.msra.mxu0 %v145
    %183 = vmatprep.subr.bf16.mxu0 0
    %184 = vmatpush2.bf16.msra.mxu0 %v144
    %185 = vmatprep.subr.bf16.mxu0 0
    %186 = vmatpush2.bf16.msra.mxu0 %v143
    %187 = vmatprep.subr.bf16.mxu0 0
    %188 = vmatpush2.bf16.msra.mxu0 %v142
    %189 = vmatprep.subr.bf16.mxu0 0
    %190 = vmatpush2.bf16.msra.mxu0 %v141
    %191 = vmatprep.subr.bf16.mxu0 0
    %192 = vmatpush2.bf16.msra.mxu0 %v140
    %193 = vmatprep.subr.bf16.mxu0 0
    %194 = vmatpush2.bf16.msra.mxu0 %v139
    %195 = vmatprep.mubr.bf16.mxu0 %v34
    %196 = vmatmul.mubr.bf16.gmra.mxu0 %v33
    %v197 = vpop.f32.mrf.mxu0
    %v198 = vadd.f32 0.0, %v197
    %v199 = vpop.f32.mrf.mxu0
    %v200 = vpop.f32.mrf.mxu0
    %v201 = vadd.f32 0.0, %v200
    %v202 = vpop.f32.mrf.mxu0
    %203 = vdwg.mxu0
    %v204 = vmul.f32 %v198, %v198
    %v205 = vmul.f32 %v201, %v201
    %206 = vadd.xlane.f32.xlu0 %v204
    %v207 = vpop.xlane.xlu0 %206
    %208 = vadd.xlane.f32.xlu0 %v205
    %v209 = vpop.xlane.xlu0 %208
    %v210 = vrsqrt.pop %v207
    %v211 = vrsqrt.pop %v209
    %v212 = vmul.f32 %v198, %v210
    %v213 = vmul.f32 %v201, %v211
    %214 = vst [vmem:[#allocation2] sm:$0xff] %v212
    %215 = vst [vmem:[#allocation2 + $0x8] sm:$0xff] %v213
    // Predicated region
    $region10: #{align_projector_forward.1} parent=1 // pred_check
      _
    $region11: #{align_projector_forward.1} parent=1 // pred_check_branch
      %217 = sbr.rel (0) target = $region13
    $region12: #{align_projector_forward.1} parent=1 // pred_region
      %s219 = ssub.s32 256, 256
      %220 = vsyncadd [#allocation3], %s219
      %s221 = sshll.u32 [#allocation2], 4
      %s222 = int_to_ptr.vmem [resolvable:$true] %s221
      %227 = dma.vmem_to_hbm [thread:$0]  %s222, 256, %s2, [#allocation3], 128, 128, 8
    $region13: #{align_projector_forward.1} parent=1 // pred_fallthru
      _
    // Predicated region
    $region14: #{align_projector_forward.1} parent=1 // pred_check
      _
    $region15: #{align_projector_forward.1} parent=1 // pred_check_branch
      %229 = sbr.rel (0) target = $region17
    $region16: #{align_projector_forward.1} parent=1 // pred_region
      %230 = dma.done [#allocation3], 256
    $region17: #{align_projector_forward.1} parent=1 // pred_fallthru
      _
    %231 = vsyncpa [#allocation3], 1

</llo_original>
